<compile_context>
chip_gen: v7x
topology: tpu7x:2x2x1
jax: 0.10.0
libtpu: 0.0.40
codegen_flags: <defaults>
</compile_context>

<pallas_src>
import jax
import jax.numpy as jnp
from jax.experimental import pallas as pl
from jax.experimental.pallas import tpu as pltpu


def _linear_head_kernel(x_ref, w_ref, b_ref, o_ref):
    # x_ref: (tb, D)  activation tile, caller dtype (bf16 recommended)
    # w_ref: (8, D)   weight; row 0 is the real Linear weight, rows 1..7 zero
    # b_ref: (1,)     f32 bias in SMEM
    # o_ref: (1, tb)  f32 logits tile, batch along the 128-lane axis
    acc = jnp.einsum(
        "od,bd->ob",
        w_ref[...],
        x_ref[...],
        preferred_element_type=jnp.float32,
    )
    # Only row 0 carries real logits; store it (lane-dense) with the bias folded in.
    o_ref[...] = acc[0:1, :] + b_ref[0]


def _vmem_capacity_bytes():
    try:
        info = pltpu.get_tpu_info()
        cap = getattr(info, "vmem_capacity_bytes", None)
        if cap:
            return int(cap)
    except Exception:
        pass
    return 64 * 1024 * 1024  # conservative fallback: v7x per-TC VMEM


def _choose_batch_tile(B, D, itemsize, vmem_cap):
    """Pick (batch_tile, grid) for the (B, D) @ (D, 1) head.

    Per-pipelined-input-buffer budget is generation-aware: ~24 MiB on
    128 MiB-VMEM parts (v5e/v6e), ~12-13 MiB on v7x (64 MiB per TC), so the
    double-buffered activation tiles plus weight/output always fit comfortably
    while keeping per-grid-step overhead (~0.35 us) a tiny fraction of the
    HBM transfer.
    """
    budget = min(24 * 1024 * 1024, vmem_cap // 5)
    tb_cap = (budget // max(D * itemsize, 1)) // 128 * 128
    tb_cap = max(128, tb_cap)
    # TODO(synk): for extreme d_model where even a 128-row double-buffered
    # tile exceeds the VMEM budget, add a D-reduction grid axis ("arbitrary")
    # with an f32 VMEM accumulator instead of shrinking the batch tile.

    if B <= min(tb_cap, 1024):
        # Small batch: one block, no pipeline, no per-step overhead.
        return B, 1

    # Large batch: target >= 4 grid steps (>= 2 per TensorCore on v7x) so the
    # auto-pipeline overlaps prefetch/writeback on each core; tile is a
    # multiple of 128 (lane-dense output).
    tb = min(tb_cap, max(128, ((pl.cdiv(B, 4) + 127) // 128) * 128))
    return tb, pl.cdiv(B, tb)


def gpt2_classifier_forward(final_hidden, weight, bias, *, batch_tile=None):
    """Pallas equivalent of GPT2Classifier.forward.

    Args:
      final_hidden: (B, D) activations (f32 or, recommended, bf16).
      weight: (1, D) Linear weight (PyTorch layout: out_features x in_features).
      bias:   (1,)   Linear bias (used in f32).
      batch_tile: optional batch-tile override (rounded to a multiple of 128
        if it implies more than one grid step).

    Returns:
      (B,) float32 logits == self.linear(final_hidden).squeeze(-1).
    """
    B, D = final_hidden.shape
    x_dtype = final_hidden.dtype
    itemsize = jnp.dtype(x_dtype).itemsize
    vmem_cap = _vmem_capacity_bytes()

    if batch_tile is None:
        tb, grid = _choose_batch_tile(B, D, itemsize, vmem_cap)
    else:
        tb = int(batch_tile)
        if tb >= B:
            tb, grid = B, 1
        else:
            tb = max(128, (tb // 128) * 128)  # legal (8,128)-aligned tile
            if tb >= B:
                tb, grid = B, 1
            else:
                grid = pl.cdiv(B, tb)

    # (1, D) -> (8, D) with zero rows 1..7: keeps every block (8, 128)-aligned.
    # Weight matches the activation dtype; accumulation stays f32.
    w8 = jnp.pad(weight.astype(x_dtype), ((0, 7), (0, 0)))
    bias_f32 = bias.astype(jnp.float32).reshape((1,))

    # Scoped-VMEM limit sized from the actual tiles (double-buffered inputs +
    # outputs + resident weight + headroom), clamped to 3/4 of physical VMEM.
    tile_bytes = tb * D * itemsize
    vmem_limit = int(2 * tile_bytes + 2 * tb * 4 + 16 * D * itemsize + (4 << 20))
    vmem_limit = max(32 << 20, vmem_limit)
    vmem_limit = min(vmem_limit, int(vmem_cap * 3 // 4))

    out = pl.pallas_call(
        _linear_head_kernel,
        out_shape=jax.ShapeDtypeStruct((1, B), jnp.float32),
        grid_spec=pltpu.PrefetchScalarGridSpec(
            num_scalar_prefetch=0,
            grid=(grid,),
            in_specs=[
                pl.BlockSpec((tb, D), lambda i: (i, 0)),   # activation tile
                pl.BlockSpec((8, D), lambda i: (0, 0)),    # weight (resident)
                pl.BlockSpec(memory_space=pltpu.MemorySpace.SMEM),  # bias scalar
            ],
            out_specs=pl.BlockSpec((1, tb), lambda i: (0, i)),  # lane-dense row
        ),
        compiler_params=pltpu.CompilerParams(
            dimension_semantics=("parallel",),
            vmem_limit_bytes=vmem_limit,
        ),
    )(final_hidden, w8, bias_f32)

    # (1, B) -> (B,) is a free reshape; bias is already applied in-kernel.
    return out[0]


def _reference(final_hidden, weight, bias):
    return (final_hidden.astype(jnp.float32) @ weight.T + bias)[:, 0]


if __name__ == "__main__":
    B, D = 8, 32  # small shapes: batch=8, d_model=32

    key = jax.random.PRNGKey(0)
    kx, kw, kb, kx2, kx3 = jax.random.split(key, 5)

    # Deterministic parameter init mimicking nn.Linear: U(-1/sqrt(D), 1/sqrt(D)).
    bound = 1.0 / (D ** 0.5)
    weight = jax.random.uniform(kw, (1, D), jnp.float32, -bound, bound)
    bias = jax.random.uniform(kb, (1,), jnp.float32, -bound, bound)

    final_hidden = jax.random.normal(kx, (B, D), jnp.float32)

    # 1) f32 activations, single block: exact vs reference.
    logits = jax.block_until_ready(gpt2_classifier_forward(final_hidden, weight, bias))
    ref = _reference(final_hidden, weight, bias)
    assert logits.shape == (B,), logits.shape
    assert jnp.allclose(logits, ref, atol=1e-5, rtol=1e-5), (logits, ref)

    # 2) bf16 activations (recommended bandwidth-bound path), f32 accumulation.
    logits_bf16 = jax.block_until_ready(
        gpt2_classifier_forward(final_hidden.astype(jnp.bfloat16), weight, bias)
    )
    assert logits_bf16.shape == (B,), logits_bf16.shape
    assert jnp.allclose(logits_bf16, ref, atol=3e-2, rtol=3e-2), (logits_bf16, ref)

    # 3) Multi-tile pipelined path (grid > 1, full blocks, resident weight).
    B2 = 256
    x2 = jax.random.normal(kx2, (B2, D), jnp.float32).astype(jnp.bfloat16)
    logits2 = jax.block_until_ready(
        gpt2_classifier_forward(x2, weight, bias, batch_tile=128)
    )
    ref2 = _reference(x2, weight, bias)
    assert logits2.shape == (B2,), logits2.shape
    assert jnp.allclose(logits2, ref2, atol=3e-2, rtol=3e-2), (logits2, ref2)

    # 4) Partial last batch tile (B not a multiple of the 128-row tile).
    B3 = 200
    x3 = jax.random.normal(kx3, (B3, D), jnp.float32)
    logits3 = jax.block_until_ready(
        gpt2_classifier_forward(x3, weight, bias, batch_tile=128)
    )
    ref3 = _reference(x3, weight, bias)
    assert logits3.shape == (B3,), logits3.shape
    assert jnp.allclose(logits3, ref3, atol=1e-5, rtol=1e-5), (logits3, ref3)

    print("KERNEL_OK")
</pallas_src>

<mosaic_0001>
module attributes {stable_mosaic.version = 11 : i64} {
  func.func @_linear_head_kernel(%arg0: i32, %arg1: memref<8x32xf32, #tpu.memory_space<vmem>>, %arg2: memref<8x32xf32, #tpu.memory_space<vmem>>, %arg3: memref<1xf32, #tpu.memory_space<smem>>, %arg4: memref<1x8xf32, #tpu.memory_space<vmem>>) attributes {dimension_semantics = [#tpu.dimension_semantics<parallel>], iteration_bounds = array<i64: 1>, scalar_prefetch = 0 : i64, scratch_operands = 0 : i64, tpu.core_type = #tpu.core_type<tc>, window_params = [{transform_indices = @transform_0, window_bounds = array<i64: 8, 32>}, {pipeline_mode = #tpu.pipeline_mode<synchronous>, transform_indices = @transform_1, window_bounds = array<i64: 8, 32>}, {transform_indices = @transform_2, window_bounds = array<i64: 1>}, {transform_indices = @transform_3, window_bounds = array<i64: 1, 8>}]} {
    %c0 = arith.constant 0 : index
    %c0_0 = arith.constant 0 : index
    %0 = vector.load %arg2[%c0, %c0_0] : memref<8x32xf32, #tpu.memory_space<vmem>>, vector<8x32xf32>
    %c0_1 = arith.constant 0 : index
    %c0_2 = arith.constant 0 : index
    %1 = vector.load %arg1[%c0_1, %c0_2] : memref<8x32xf32, #tpu.memory_space<vmem>>, vector<8x32xf32>
    "tpu.trace_start"() <{level = 10 : i32, message = "od,bd->ob"}> : () -> ()
    %cst = arith.constant dense<0.000000e+00> : vector<8x8xf32>
    %2 = tpu.matmul %0, %1, %cst {dimension_numbers = #tpu.dot_dimension_numbers<[1], [1], [0], [0], [0, 0, 1, 0], [], []>} : vector<8x32xf32>, vector<8x32xf32>, vector<8x8xf32> -> vector<8x8xf32>
    "tpu.trace_stop"() : () -> ()
    %3 = vector.extract_strided_slice %2 {offsets = [0, 0], sizes = [1, 8], strides = [1, 1]} : vector<8x8xf32> to vector<1x8xf32>
    %c0_3 = arith.constant 0 : index
    %4 = memref.load %arg3[%c0_3] : memref<1xf32, #tpu.memory_space<smem>>
    %5 = vector.broadcast %4 : f32 to vector<1x8xf32>
    %6 = arith.addf %3, %5 : vector<1x8xf32>
    %c0_4 = arith.constant 0 : index
    %c0_5 = arith.constant 0 : index
    %7 = vector.load %arg4[%c0_4, %c0_5] : memref<1x8xf32, #tpu.memory_space<vmem>>, vector<1x8xf32>
    tpu.vector_store %arg4[%c0_4, %c0_5], %6 {strides = array<i32>} : memref<1x8xf32, #tpu.memory_space<vmem>>, vector<1x8xf32>,
    return
  }
  func.func @transform_0(%arg0: i32) -> (i32, i32) {
    %c0_i32 = arith.constant 0 : i32
    %c0_i32_0 = arith.constant 0 : i32
    return %arg0, %c0_i32 : i32, i32
  }
  func.func @transform_1(%arg0: i32) -> (i32, i32) {
    %c0_i32 = arith.constant 0 : i32
    %c0_i32_0 = arith.constant 0 : i32
    %c0_i32_1 = arith.constant 0 : i32
    return %c0_i32, %c0_i32_0 : i32, i32
  }
  func.func @transform_2(%arg0: i32) -> i32 {
    %c0_i32 = arith.constant 0 : i32
    %c0_i32_0 = arith.constant 0 : i32
    return %c0_i32 : i32
  }
  func.func @transform_3(%arg0: i32) -> (i32, i32) {
    %c0_i32 = arith.constant 0 : i32
    %c0_i32_0 = arith.constant 0 : i32
    return %c0_i32, %arg0 : i32, i32
  }
}

</mosaic_0001>

<llo_original>
// kernel: tpu_custom_call.1
$region0: #{tpu_custom_call.1}
  #allocation0 [shape = 'u32[]', space=smem, size = 0x4, offset = 0x4, fixed_abs, tag = 'smem constant byte address 0x4 - core index']
  #allocation1 [shape = 'u32[144,128]{1,0:T(1,128)}', space=vmem, size = 0x12000, scoped, tag = 'internal scratch']
  #allocation2 [shape = 'f32[1]{0:T(128)S(6)}', space=smem, size = 0x200, scoped, tag = 'scoped memory for tpu_custom_call.1']
  %s0 = inlined_call_operand.hbm [shape: f32[8,32], index: 0, kind: input, shape index: {}]
  %s1 = inlined_call_operand.hbm [shape: f32[8,32], index: 1, kind: input, shape index: {}]
  %s2 = inlined_call_operand.<no memory space> [shape: f32[1], index: 2, kind: input, shape index: {}]
  %s3 = inlined_call_operand.hbm [shape: f32[1,8], index: 3, kind: output, shape index: {}]
  %s4 = sld [smem:[#allocation0]]
  $region30: #{tpu_custom_call.1} parent=0
    _
  %s6 = ssub.s32 1, %s4
  %s7 = scalar_select 0, %s6, %s4
  %8 = sst [smem:[#allocation2]] %s2
  $region1: #{tpu_custom_call.1} parent=0
    #allocation3 [shape = 'u8[4096]{0}', space=vmem, size = 0x1000, scoped, tag = 'input window, operand 0, single buffered']
    #allocation4 [shape = 's32[1]{0}', space=sflag, size = 0x4, scoped, tag = 'scoped memory for tpu_custom_call.1']
    #allocation5 [shape = 's32[1]{0}', space=sflag, size = 0x4, scoped, tag = 'scoped memory for tpu_custom_call.1']
    #allocation6 [shape = 'u8[4096]{0}', space=vmem, size = 0x1000, scoped, tag = 'input window, operand 1, single buffered']
    #allocation7 [shape = 's32[1]{0}', space=sflag, size = 0x4, scoped, tag = 'scoped memory for tpu_custom_call.1']
    #allocation8 [shape = 'u8[512]{0}', space=vmem, size = 0x400, scoped, tag = 'output window, operand 0, single buffered']
    %9 = vsyncpa [#allocation4], 0
    %10 = vsyncpa [#allocation7], 0
    %11 = vsyncpa [#allocation5], 0
    // Predicated region
    $region2: #{tpu_custom_call.1} parent=1 // pred_check
      _
    $region3: #{tpu_custom_call.1} parent=1 // pred_check_branch
      %13 = sbr.rel (0) target = $region5
    $region4: #{tpu_custom_call.1} parent=1 // pred_region
      %s15 = ssub.s32 128, 128
      %16 = vsyncadd [#allocation4], %s15
      %s18 = sshll.u32 [#allocation3], 4
      %s19 = int_to_ptr.vmem [resolvable:$true] %s18
      %21 = dma.hbm_to_vmem [thread:$0]  %s0, 128, %s19, [#allocation4]
    $region5: #{tpu_custom_call.1} parent=1 // pred_fallthru
      _
    // Predicated region
    $region6: #{tpu_custom_call.1} parent=1 // pred_check
      _
    $region7: #{tpu_custom_call.1} parent=1 // pred_check_branch
      %23 = sbr.rel (0) target = $region9
    $region8: #{tpu_custom_call.1} parent=1 // pred_region
      %s25 = ssub.s32 128, 128
      %26 = vsyncadd [#allocation7], %s25
      %s28 = sshll.u32 [#allocation6], 4
      %s29 = int_to_ptr.vmem [resolvable:$true] %s28
      %31 = dma.hbm_to_vmem [thread:$0]  %s1, 128, %s29, [#allocation7]
    $region9: #{tpu_custom_call.1} parent=1 // pred_fallthru
      _
    // Predicated region
    $region10: #{tpu_custom_call.1} parent=1 // pred_check
      _
    $region11: #{tpu_custom_call.1} parent=1 // pred_check_branch
      %33 = sbr.rel (0) target = $region13
    $region12: #{tpu_custom_call.1} parent=1 // pred_region
      _
    $region13: #{tpu_custom_call.1} parent=1 // pred_fallthru
      _
    // Predicated region
    $region14: #{tpu_custom_call.1} parent=1 // pred_check
      _
    $region15: #{tpu_custom_call.1} parent=1 // pred_check_branch
      %35 = sbr.rel (0) target = $region17
    $region16: #{tpu_custom_call.1} parent=1 // pred_region
      %36 = dma.done [#allocation4], 128
    $region17: #{tpu_custom_call.1} parent=1 // pred_fallthru
      _
    // Predicated region
    $region18: #{tpu_custom_call.1} parent=1 // pred_check
      _
    $region19: #{tpu_custom_call.1} parent=1 // pred_check_branch
      %38 = sbr.rel (0) target = $region21
    $region20: #{tpu_custom_call.1} parent=1 // pred_region
      %39 = dma.done [#allocation7], 128
    $region21: #{tpu_custom_call.1} parent=1 // pred_fallthru
      _
    %v40 = vld [vmem:[#allocation6] sm:$0xff]
    %v41 = vld [vmem:[#allocation3] sm:$0xff]
    %vm42 = vcmask 261120
    %v44 = vsel %vm42, %v40, 0
    %v47 = vsel %vm42, %v41, 0
    %49 = vmatprep.subr.mxu0 0.0
    %50 = vmatpush1.xpose.msra.mxu0 %v47
    %51 = vmatprep.subr.mxu0 0.0
    %52 = vmatpush1.xpose.msra.mxu0 0.0
    %53 = vmatprep.subr.mxu0 0.0
    %54 = vmatpush1.xpose.msra.mxu0 0.0
    %55 = vmatprep.subr.mxu0 0.0
    %56 = vmatpush1.xpose.msra.mxu0 0.0
    %57 = vmatprep.subr.mxu0 0.0
    %58 = vmatpush1.xpose.msra.mxu0 0.0
    %59 = vmatprep.subr.mxu0 0.0
    %60 = vmatpush1.xpose.msra.mxu0 0.0
    %61 = vmatprep.subr.mxu0 0.0
    %62 = vmatpush1.xpose.msra.mxu0 0.0
    %63 = vmatprep.subr.mxu0 0.0
    %64 = vmatpush1.xpose.msra.mxu0 0.0
    %65 = vmatprep.subr.mxu0 0.0
    %66 = vmatpush1.xpose.msra.mxu0 0.0
    %67 = vmatprep.subr.mxu0 0.0
    %68 = vmatpush1.xpose.msra.mxu0 0.0
    %69 = vmatprep.subr.mxu0 0.0
    %70 = vmatpush1.xpose.msra.mxu0 0.0
    %71 = vmatprep.subr.mxu0 0.0
    %72 = vmatpush1.xpose.msra.mxu0 0.0
    %73 = vmatprep.subr.mxu0 0.0
    %74 = vmatpush1.xpose.msra.mxu0 0.0
    %75 = vmatprep.subr.mxu0 0.0
    %76 = vmatpush1.xpose.msra.mxu0 0.0
    %77 = vmatprep.subr.mxu0 0.0
    %78 = vmatpush1.xpose.msra.mxu0 0.0
    %79 = vmatprep.subr.mxu0 0.0
    %80 = vmatpush1.xpose.msra.mxu0 0.0
    %81 = vmatprep.subr.mxu0 0.0
    %82 = vmatpush1.xpose.msra.mxu0 0.0
    %83 = vmatprep.subr.mxu0 0.0
    %84 = vmatpush1.xpose.msra.mxu0 0.0
    %85 = vmatprep.subr.mxu0 0.0
    %86 = vmatpush1.xpose.msra.mxu0 0.0
    %87 = vmatprep.subr.mxu0 0.0
    %88 = vmatpush1.xpose.msra.mxu0 0.0
    %89 = vmatprep.subr.mxu0 0.0
    %90 = vmatpush1.xpose.msra.mxu0 0.0
    %91 = vmatprep.subr.mxu0 0.0
    %92 = vmatpush1.xpose.msra.mxu0 0.0
    %93 = vmatprep.subr.mxu0 0.0
    %94 = vmatpush1.xpose.msra.mxu0 0.0
    %95 = vmatprep.subr.mxu0 0.0
    %96 = vmatpush1.xpose.msra.mxu0 0.0
    %97 = vmatprep.subr.mxu0 0.0
    %98 = vmatpush1.xpose.msra.mxu0 0.0
    %99 = vmatprep.subr.mxu0 0.0
    %100 = vmatpush1.xpose.msra.mxu0 0.0
    %101 = vmatprep.subr.mxu0 0.0
    %102 = vmatpush1.xpose.msra.mxu0 0.0
    %103 = vmatprep.subr.mxu0 0.0
    %104 = vmatpush1.xpose.msra.mxu0 0.0
    %105 = vmatprep.subr.mxu0 0.0
    %106 = vmatpush1.xpose.msra.mxu0 0.0
    %107 = vmatprep.subr.mxu0 0.0
    %108 = vmatpush1.xpose.msra.mxu0 0.0
    %109 = vmatprep.subr.mxu0 0.0
    %110 = vmatpush1.xpose.msra.mxu0 0.0
    %111 = vmatprep.subr.mxu0 0.0
    %112 = vmatpush1.xpose.msra.mxu0 0.0
    %113 = vmatprep.mubr.f32.mxu0 0.0
    %114 = vmatmul.mubr.f32.gmra.mrb[0].mxu0 %v44
    %v115 = vpop.f32.mrb[0].mxu0
    %v116 = vadd.f32 0.0, %v115
    %v117 = vpop.f32.mrb[0].mxu0
    %118 = vdwg.mxu0
    %s119 = sld [smem:[#allocation2]]
    %v120 = vstv %s119
    %v121 = vadd.f32 %v116, %v120
    %vm122 = vcmask 57344
    %123 = vst.msk [vmem:[#allocation8] sm:$0x1] %vm122, %v121
    // Predicated region
    $region22: #{tpu_custom_call.1} parent=1 // pred_check
      _
    $region23: #{tpu_custom_call.1} parent=1 // pred_check_branch
      %125 = sbr.rel (0) target = $region25
    $region24: #{tpu_custom_call.1} parent=1 // pred_region
      %s127 = ssub.s32 16, 16
      %128 = vsyncadd [#allocation5], %s127
      %s130 = sshll.u32 [#allocation8], 4
      %s131 = int_to_ptr.vmem [resolvable:$true] %s130
      %133 = dma.vmem_to_hbm [thread:$0]  %s131, 16, %s3, [#allocation5]
    $region25: #{tpu_custom_call.1} parent=1 // pred_fallthru
      _
    // Predicated region
    $region26: #{tpu_custom_call.1} parent=1 // pred_check
      _
    $region27: #{tpu_custom_call.1} parent=1 // pred_check_branch
      %135 = sbr.rel (0) target = $region29
    $region28: #{tpu_custom_call.1} parent=1 // pred_region
      %136 = dma.done [#allocation5], 16
    $region29: #{tpu_custom_call.1} parent=1 // pred_fallthru
      _
    %137 = vsyncpa [#allocation4], 1
    %138 = vsyncpa [#allocation7], 1
    %139 = vsyncpa [#allocation5], 1

</llo_original>
